<compile_context>
chip_gen: v6e
topology: v6e:2x2x1
jax: 0.10.0
libtpu: 0.0.40
codegen_flags: <defaults>
</compile_context>

<pallas_src>
import jax
import jax.numpy as jnp
from jax.experimental import pallas as pl
from jax.experimental.pallas import tpu as pltpu


_NUM_FEATS = 16  # 7 customer feats + 2 depot-loc feats + 7 zero-pad rows


def _round_up(x, m):
    return ((x + m - 1) // m) * m


def _init_embed_kernel(feats_ref, w_ref, out_ref):
    feats = feats_ref[...]                                         # [16, TR]
    # torch.nan_to_num(x, nan=0.0, posinf=0.0, neginf=0.0)
    feats = jnp.where(jnp.isfinite(feats), feats, 0.0)
    # Contract over the feature (sublane) axis: [16, TR] x [16, E] -> [TR, E].
    out = jax.lax.dot_general(
        feats, w_ref[...],
        dimension_numbers=(((0,), (0,)), ((), ())),
        preferred_element_type=jnp.float32)
    out_ref[...] = out.astype(out_ref.dtype)


def mtvrp_init_embedding(locs, demand_linehaul, demand_backhaul,
                         time_windows, service_time, w_global, w_cust,
                         *, row_block=8192, out_dtype=None):
    """Pallas implementation of MTVRPInitEmbedding.forward.

    Args:
      locs:            [B, N, 2] float32
      demand_linehaul: [B, N]    float32
      demand_backhaul: [B, N]    float32
      time_windows:    [B, N, 2] float32
      service_time:    [B, N]    float32
      w_global:        [2, E]    float32  (nn.Linear weight, transposed)
      w_cust:          [7, E]    float32  (nn.Linear weight, transposed)
      row_block: nominal rows of the flattened (B*N) axis per grid step at
        E=128; scaled down automatically for larger embed dims so the
        double-buffered blocks stay well inside the scoped VMEM limit.
      out_dtype: output dtype; defaults to the input dtype (f32).  Pass
        jnp.bfloat16 to halve the dominant output HBM write if the consumer
        tolerates it (accumulation stays f32 either way).
    Returns:
      [B, N, E] (depot embedding at node 0, customers at 1..N-1).
    """
    B, N, _ = locs.shape
    E = w_global.shape[1]
    dtype = locs.dtype
    out_dtype = dtype if out_dtype is None else out_dtype
    rows = B * N
    E_pad = _round_up(E, 128)  # keep output lane-dense even for odd embed dims

    # ---- wrapper-side feature assembly: one lane-dense [16, B*N] slab ------
    dl = demand_linehaul.reshape(1, rows)
    db = demand_backhaul.reshape(1, rows)
    st = service_time.reshape(1, rows)
    tw_t = time_windows.reshape(rows, 2).T                          # [2, B*N]
    locs_t = locs.reshape(rows, 2).T                                # [2, B*N]
    is_depot = ((jnp.arange(rows) % N) == 0)[None, :]               # [1, B*N]

    cust = jnp.concatenate([dl, db, tw_t, st, locs_t], axis=0)      # [7, B*N]
    cust = jnp.where(is_depot, jnp.zeros((), dtype), cust)
    depot = jnp.where(is_depot, locs_t, jnp.zeros((), dtype))       # [2, B*N]
    pad = jnp.zeros((_NUM_FEATS - 9, rows), dtype)
    feats_t = jnp.concatenate([cust, depot, pad], axis=0)           # [16, B*N]

    # Combined projection: rows 0..6 -> customer Linear, rows 7..8 -> global.
    w = jnp.zeros((_NUM_FEATS, E_pad), w_cust.dtype)
    w = w.at[0:7, :E].set(w_cust)
    w = w.at[7:9, :E].set(w_global)

    # ---- row tiling over the flattened (B*N) axis ---------------------------
    # Cap the tile so 2x(16, tr) feats + 2x(tr, E_pad) output buffers stay
    # ~<= 9 MiB (E=128) regardless of embed dim; force >= 2 grid steps for
    # v7x megacore when the problem is big enough.
    tr_cap = max(128, (row_block * 128 // E_pad) // 128 * 128)
    if rows <= 2 * 128:
        tr = rows                                   # one full-extent block
    else:
        tr = min(tr_cap, _round_up(pl.cdiv(rows, 2), 128))
    grid = (pl.cdiv(rows, tr),)

    out = pl.pallas_call(
        _init_embed_kernel,
        out_shape=jax.ShapeDtypeStruct((rows, E_pad), out_dtype),
        grid_spec=pltpu.PrefetchScalarGridSpec(
            num_scalar_prefetch=0,
            grid=grid,
            in_specs=[
                pl.BlockSpec((_NUM_FEATS, tr), lambda r: (0, r)),   # feats_T
                pl.BlockSpec((_NUM_FEATS, E_pad), lambda r: (0, 0)),  # W (resident)
            ],
            out_specs=pl.BlockSpec((tr, E_pad), lambda r: (r, 0)),
        ),
        compiler_params=pltpu.CompilerParams(
            dimension_semantics=("parallel",),
            vmem_limit_bytes=32 * 1024 * 1024,
        ),
    )(feats_t, w)

    if E_pad != E:
        out = out[:, :E]
    return out.reshape(B, N, E)


def _reference(locs, dl, db, tw, st, w_global, w_cust):
    # Pure-JAX mirror of the PyTorch forward for validation.
    clean = lambda x: jnp.where(jnp.isfinite(x), x, jnp.zeros_like(x))
    gf = clean(locs[:, :1, :])
    cf = clean(jnp.concatenate(
        [dl[..., 1:, None], db[..., 1:, None], tw[..., 1:, :],
         st[..., 1:, None], locs[:, 1:, :]], axis=-1))
    return jnp.concatenate([gf @ w_global, cf @ w_cust], axis=-2)


if __name__ == "__main__":
    B, N, E = 2, 8, 128  # 1 depot + 7 customers; module default embed_dim=128
    key = jax.random.PRNGKey(0)
    k = jax.random.split(key, 7)

    locs = jax.random.uniform(k[0], (B, N, 2), jnp.float32)
    demand_linehaul = jax.random.uniform(k[1], (B, N), jnp.float32)
    demand_backhaul = jax.random.uniform(k[2], (B, N), jnp.float32)
    time_windows = jax.random.uniform(k[3], (B, N, 2), jnp.float32)
    service_time = jax.random.uniform(k[4], (B, N), jnp.float32)

    # Exercise nan_to_num behavior on both customer and depot paths.
    demand_backhaul = demand_backhaul.at[0, 3].set(jnp.nan)
    time_windows = time_windows.at[1, 2, 1].set(jnp.inf)
    locs = locs.at[1, 0, 0].set(-jnp.inf)

    # Deterministic nn.Linear-style params (bias=False), stored transposed
    # as [in_features, embed_dim].
    w_global = jax.random.uniform(k[5], (2, E), jnp.float32,
                                  minval=-1.0, maxval=1.0) / jnp.sqrt(2.0)
    w_cust = jax.random.uniform(k[6], (7, E), jnp.float32,
                                minval=-1.0, maxval=1.0) / jnp.sqrt(7.0)

    out = mtvrp_init_embedding(locs, demand_linehaul, demand_backhaul,
                               time_windows, service_time, w_global, w_cust)
    out = jax.block_until_ready(out)

    ref = _reference(locs, demand_linehaul, demand_backhaul,
                     time_windows, service_time, w_global, w_cust)
    assert out.shape == (B, N, E)
    assert jnp.allclose(out, ref, atol=1e-5, rtol=1e-5), "mismatch vs reference"

    print("KERNEL_OK")
</pallas_src>

<mosaic_0001>
module attributes {stable_mosaic.version = 11 : i64} {
  func.func @_init_embed_kernel(%arg0: i32, %arg1: memref<16x16xf32, #tpu.memory_space<vmem>>, %arg2: memref<16x128xf32, #tpu.memory_space<vmem>>, %arg3: memref<16x128xf32, #tpu.memory_space<vmem>>) attributes {dimension_semantics = [#tpu.dimension_semantics<parallel>], iteration_bounds = array<i64: 1>, scalar_prefetch = 0 : i64, scratch_operands = 0 : i64, tpu.core_type = #tpu.core_type<tc>, window_params = [{transform_indices = @transform_0, window_bounds = array<i64: 16, 16>}, {pipeline_mode = #tpu.pipeline_mode<synchronous>, transform_indices = @transform_1, window_bounds = array<i64: 16, 128>}, {transform_indices = @transform_2, window_bounds = array<i64: 16, 128>}]} {
    %c0 = arith.constant 0 : index
    %c0_0 = arith.constant 0 : index
    %0 = vector.load %arg1[%c0, %c0_0] : memref<16x16xf32, #tpu.memory_space<vmem>>, vector<16x16xf32>
    %1 = tpu.weird %0 : vector<16x16xf32> -> vector<16x16xi1>
    %cst = arith.constant dense<true> : vector<16x16xi1>
    %2 = arith.xori %1, %cst : vector<16x16xi1>
    %cst_1 = arith.constant 0.000000e+00 : f32
    %3 = vector.broadcast %cst_1 : f32 to vector<16x16xf32>
    %4 = arith.select %2, %0, %3 : vector<16x16xi1>, vector<16x16xf32>
    %c0_2 = arith.constant 0 : index
    %c0_3 = arith.constant 0 : index
    %5 = vector.load %arg2[%c0_2, %c0_3] : memref<16x128xf32, #tpu.memory_space<vmem>>, vector<16x128xf32>
    %cst_4 = arith.constant dense<0.000000e+00> : vector<16x128xf32>
    %6 = tpu.matmul %4, %5, %cst_4 {dimension_numbers = #tpu.dot_dimension_numbers<[0], [0], [1], [1], [0, 1, 1, 1], [], []>} : vector<16x16xf32>, vector<16x128xf32>, vector<16x128xf32> -> vector<16x128xf32>
    %c0_5 = arith.constant 0 : index
    %c0_6 = arith.constant 0 : index
    %7 = vector.load %arg3[%c0_5, %c0_6] : memref<16x128xf32, #tpu.memory_space<vmem>>, vector<16x128xf32>
    tpu.vector_store %arg3[%c0_5, %c0_6], %6 {strides = array<i32>} : memref<16x128xf32, #tpu.memory_space<vmem>>, vector<16x128xf32>,
    return
  }
  func.func @transform_0(%arg0: i32) -> (i32, i32) {
    %c0_i32 = arith.constant 0 : i32
    %c0_i32_0 = arith.constant 0 : i32
    return %c0_i32, %arg0 : i32, i32
  }
  func.func @transform_1(%arg0: i32) -> (i32, i32) {
    %c0_i32 = arith.constant 0 : i32
    %c0_i32_0 = arith.constant 0 : i32
    %c0_i32_1 = arith.constant 0 : i32
    return %c0_i32, %c0_i32_0 : i32, i32
  }
  func.func @transform_2(%arg0: i32) -> (i32, i32) {
    %c0_i32 = arith.constant 0 : i32
    %c0_i32_0 = arith.constant 0 : i32
    return %arg0, %c0_i32 : i32, i32
  }
}

</mosaic_0001>

<llo_original>
// kernel: tpu_custom_call.1
$region0: #{tpu_custom_call.1}
  #allocation0 [shape = 'u32[]', space=smem, size = 0x4, offset = 0x4, fixed_abs, tag = 'smem constant byte address 0x4 - core index']
  #allocation1 [shape = 'u32[144,128]{1,0:T(1,128)}', space=vmem, size = 0x12000, scoped, tag = 'internal scratch']
  %s0 = inlined_call_operand.hbm [shape: f32[16,16], index: 0, kind: input, shape index: {}]
  %s1 = inlined_call_operand.hbm [shape: f32[16,128], index: 1, kind: input, shape index: {}]
  %s2 = inlined_call_operand.hbm [shape: f32[16,128], index: 2, kind: output, shape index: {}]
  %s3 = sld [smem:[#allocation0]]
  $region26: #{tpu_custom_call.1} parent=0
    _
  %s5 = ssub.s32 1, %s3
  %s6 = scalar_select 0, %s5, %s3
  $region1: #{tpu_custom_call.1} parent=0
    #allocation2 [shape = 'u8[8192]{0}', space=vmem, size = 0x2000, scoped, tag = 'input window, operand 0, single buffered']
    #allocation3 [shape = 's32[1]{0}', space=sflag, size = 0x4, scoped, tag = 'scoped memory for tpu_custom_call.1']
    #allocation4 [shape = 's32[1]{0}', space=sflag, size = 0x4, scoped, tag = 'scoped memory for tpu_custom_call.1']
    #allocation5 [shape = 'u8[8192]{0}', space=vmem, size = 0x2000, scoped, tag = 'input window, operand 1, single buffered']
    #allocation6 [shape = 's32[1]{0}', space=sflag, size = 0x4, scoped, tag = 'scoped memory for tpu_custom_call.1']
    #allocation7 [shape = 'u8[8192]{0}', space=vmem, size = 0x2000, scoped, tag = 'output window, operand 0, single buffered']
    %7 = vsyncpa [#allocation3], 0
    %8 = vsyncpa [#allocation6], 0
    %9 = vsyncpa [#allocation4], 0
    // Predicated region
    $region2: #{tpu_custom_call.1} parent=1 // pred_check
      _
    $region3: #{tpu_custom_call.1} parent=1 // pred_check_branch
      %11 = sbr.rel (0) target = $region5
    $region4: #{tpu_custom_call.1} parent=1 // pred_region
      %s13 = ssub.s32 256, 256
      %14 = vsyncadd [#allocation3], %s13
      %s15 = sshll.u32 [#allocation2], 4
      %s16 = int_to_ptr.vmem [resolvable:$true] %s15
      %21 = dma.hbm_to_vmem [thread:$0]  %s0, 256, %s16, [#allocation3], 128, 128, 8
    $region5: #{tpu_custom_call.1} parent=1 // pred_fallthru
      _
    // Predicated region
    $region6: #{tpu_custom_call.1} parent=1 // pred_check
      _
    $region7: #{tpu_custom_call.1} parent=1 // pred_check_branch
      %23 = sbr.rel (0) target = $region9
    $region8: #{tpu_custom_call.1} parent=1 // pred_region
      %s25 = ssub.s32 256, 256
      %26 = vsyncadd [#allocation6], %s25
      %s27 = sshll.u32 [#allocation5], 4
      %s28 = int_to_ptr.vmem [resolvable:$true] %s27
      %33 = dma.hbm_to_vmem [thread:$0]  %s1, 256, %s28, [#allocation6], 128, 128, 8
    $region9: #{tpu_custom_call.1} parent=1 // pred_fallthru
      _
    // Predicated region
    $region10: #{tpu_custom_call.1} parent=1 // pred_check
      _
    $region11: #{tpu_custom_call.1} parent=1 // pred_check_branch
      %35 = sbr.rel (0) target = $region13
    $region12: #{tpu_custom_call.1} parent=1 // pred_region
      %36 = dma.done [#allocation3], 256
    $region13: #{tpu_custom_call.1} parent=1 // pred_fallthru
      _
    // Predicated region
    $region14: #{tpu_custom_call.1} parent=1 // pred_check
      _
    $region15: #{tpu_custom_call.1} parent=1 // pred_check_branch
      %38 = sbr.rel (0) target = $region17
    $region16: #{tpu_custom_call.1} parent=1 // pred_region
      %39 = dma.done [#allocation6], 256
    $region17: #{tpu_custom_call.1} parent=1 // pred_fallthru
      _
    %v40 = vld [vmem:[#allocation2] sm:$0xff]
    %v41 = vld [vmem:[#allocation2 + $0x8] sm:$0xff]
    %vm42 = vweird.f32 %v40
    %vm43 = vweird.f32 %v41
    %vm44 = vmxor %vm42, 1
    %vm45 = vmxor %vm43, 1
    %v46 = vsel %vm44, %v40, 0.0
    %v47 = vsel %vm45, %v41, 0.0
    %v48 = vld [vmem:[#allocation5] sm:$0xff]
    %v49 = vld [vmem:[#allocation5 + $0x8] sm:$0xff]
    %50 = vxpose.xlu0.b32.start [1/16] %v46, 128
    %51 = vxpose.xlu0.b32.cont [2/16] %v47, 128
    %52 = vxpose.xlu0.b32.cont [3/16] 0.0, 128
    %53 = vxpose.xlu0.b32.cont [4/16] 0.0, 128
    %54 = vxpose.xlu0.b32.cont [5/16] 0.0, 128
    %55 = vxpose.xlu0.b32.cont [6/16] 0.0, 128
    %56 = vxpose.xlu0.b32.cont [7/16] 0.0, 128
    %57 = vxpose.xlu0.b32.cont [8/16] 0.0, 128
    %58 = vxpose.xlu0.b32.cont [9/16] 0.0, 128
    %59 = vxpose.xlu0.b32.cont [10/16] 0.0, 128
    %60 = vxpose.xlu0.b32.cont [11/16] 0.0, 128
    %61 = vxpose.xlu0.b32.cont [12/16] 0.0, 128
    %62 = vxpose.xlu0.b32.cont [13/16] 0.0, 128
    %63 = vxpose.xlu0.b32.cont [14/16] 0.0, 128
    %64 = vxpose.xlu0.b32.cont [15/16] 0.0, 128
    %65 = vxpose.xlu0.b32.end [16/16] 0.0, 128
    %v66 = vpop.trf.xlu0
    %v67 = vpop.trf.xlu0
    %v68 = vpop.trf.xlu0
    %v69 = vpop.trf.xlu0
    %v70 = vpop.trf.xlu0
    %v71 = vpop.trf.xlu0
    %v72 = vpop.trf.xlu0
    %v73 = vpop.trf.xlu0
    %v74 = vpop.trf.xlu0
    %v75 = vpop.trf.xlu0
    %v76 = vpop.trf.xlu0
    %v77 = vpop.trf.xlu0
    %v78 = vpop.trf.xlu0
    %v79 = vpop.trf.xlu0
    %v80 = vpop.trf.xlu0
    %v81 = vpop.trf.xlu0
    %vm82 = vcmask 130048
    %v84 = vsel %vm82, %v66, 0
    %v87 = vsel %vm82, %v67, 0
    %89 = vmatprep.subr.mxu0 0.0
    %90 = vmatpush1.msra.mxu0 0.0
    %91 = vmatprep.subr.mxu0 0.0
    %92 = vmatpush1.msra.mxu0 0.0
    %93 = vmatprep.subr.mxu0 0.0
    %94 = vmatpush1.msra.mxu0 0.0
    %95 = vmatprep.subr.mxu0 0.0
    %96 = vmatpush1.msra.mxu0 0.0
    %97 = vmatprep.subr.mxu0 0.0
    %98 = vmatpush1.msra.mxu0 0.0
    %99 = vmatprep.subr.mxu0 0.0
    %100 = vmatpush1.msra.mxu0 0.0
    %101 = vmatprep.subr.mxu0 0.0
    %102 = vmatpush1.msra.mxu0 0.0
    %103 = vmatprep.subr.mxu0 0.0
    %104 = vmatpush1.msra.mxu0 0.0
    %105 = vmatprep.subr.mxu0 0.0
    %106 = vmatpush1.msra.mxu0 0.0
    %107 = vmatprep.subr.mxu0 0.0
    %108 = vmatpush1.msra.mxu0 0.0
    %109 = vmatprep.subr.mxu0 0.0
    %110 = vmatpush1.msra.mxu0 0.0
    %111 = vmatprep.subr.mxu0 0.0
    %112 = vmatpush1.msra.mxu0 0.0
    %113 = vmatprep.subr.mxu0 0.0
    %114 = vmatpush1.msra.mxu0 0.0
    %115 = vmatprep.subr.mxu0 0.0
    %116 = vmatpush1.msra.mxu0 0.0
    %117 = vmatprep.subr.mxu0 0.0
    %118 = vmatpush1.msra.mxu0 %v49
    %119 = vmatprep.subr.mxu0 0.0
    %120 = vmatpush1.msra.mxu0 %v48
    %121 = vmatprep.subr.mxu0 0.0
    %122 = vmatpush2.msra.mxu0 0.0
    %123 = vmatprep.subr.mxu0 0.0
    %124 = vmatpush2.msra.mxu0 0.0
    %125 = vmatprep.subr.mxu0 0.0
    %126 = vmatpush2.msra.mxu0 0.0
    %127 = vmatprep.subr.mxu0 0.0
    %128 = vmatpush2.msra.mxu0 0.0
    %129 = vmatprep.subr.mxu0 0.0
    %130 = vmatpush2.msra.mxu0 0.0
    %131 = vmatprep.subr.mxu0 0.0
    %132 = vmatpush2.msra.mxu0 0.0
    %133 = vmatprep.subr.mxu0 0.0
    %134 = vmatpush2.msra.mxu0 0.0
    %135 = vmatprep.subr.mxu0 0.0
    %136 = vmatpush2.msra.mxu0 0.0
    %137 = vmatprep.subr.mxu0 0.0
    %138 = vmatpush2.msra.mxu0 0.0
    %139 = vmatprep.subr.mxu0 0.0
    %140 = vmatpush2.msra.mxu0 0.0
    %141 = vmatprep.subr.mxu0 0.0
    %142 = vmatpush2.msra.mxu0 0.0
    %143 = vmatprep.subr.mxu0 0.0
    %144 = vmatpush2.msra.mxu0 0.0
    %145 = vmatprep.subr.mxu0 0.0
    %146 = vmatpush2.msra.mxu0 0.0
    %147 = vmatprep.subr.mxu0 0.0
    %148 = vmatpush2.msra.mxu0 0.0
    %149 = vmatprep.subr.mxu0 0.0
    %150 = vmatpush2.msra.mxu0 0.0
    %151 = vmatprep.subr.mxu0 0.0
    %152 = vmatpush2.msra.mxu0 0.0
    %153 = vmatprep.mubr.f32.mxu0 0.0
    %154 = vmatmul.mubr.f32.gmra.mxu0 %v84
    %v155 = vpop.f32.mrf.mxu0
    %v156 = vadd.f32 0.0, %v155
    %v157 = vpop.f32.mrf.mxu0
    %158 = vmatprep.mubr.f32.mxu0 0.0
    %159 = vmatmul.mubr.f32.gmra.mxu0 %v87
    %v160 = vpop.f32.mrf.mxu0
    %v161 = vadd.f32 0.0, %v160
    %v162 = vpop.f32.mrf.mxu0
    %163 = vdwg.mxu0
    %164 = vst [vmem:[#allocation7] sm:$0xff] %v156
    %165 = vst [vmem:[#allocation7 + $0x8] sm:$0xff] %v161
    // Predicated region
    $region18: #{tpu_custom_call.1} parent=1 // pred_check
      _
    $region19: #{tpu_custom_call.1} parent=1 // pred_check_branch
      %167 = sbr.rel (0) target = $region21
    $region20: #{tpu_custom_call.1} parent=1 // pred_region
      %s169 = ssub.s32 256, 256
      %170 = vsyncadd [#allocation4], %s169
      %s171 = sshll.u32 [#allocation7], 4
      %s172 = int_to_ptr.vmem [resolvable:$true] %s171
      %177 = dma.vmem_to_hbm [thread:$0]  %s172, 256, %s2, [#allocation4], 128, 128, 8
    $region21: #{tpu_custom_call.1} parent=1 // pred_fallthru
      _
    // Predicated region
    $region22: #{tpu_custom_call.1} parent=1 // pred_check
      _
    $region23: #{tpu_custom_call.1} parent=1 // pred_check_branch
      %179 = sbr.rel (0) target = $region25
    $region24: #{tpu_custom_call.1} parent=1 // pred_region
      %180 = dma.done [#allocation4], 256
    $region25: #{tpu_custom_call.1} parent=1 // pred_fallthru
      _
    %181 = vsyncpa [#allocation3], 1
    %182 = vsyncpa [#allocation6], 1
    %183 = vsyncpa [#allocation4], 1

</llo_original>
